<compile_context>
chip_gen: v7x
topology: tpu7x:2x2x1
jax: 0.10.0
libtpu: 0.0.40
codegen_flags: <defaults>
</compile_context>

<pallas_src>
import functools

import jax
import jax.numpy as jnp
from jax import lax
from jax.experimental import pallas as pl
from jax.experimental.pallas import tpu as pltpu

_LANE = 128


# -----------------------------------------------------------------------------
# Single-pass kernel: one (bt, C, HW) slab per grid step (HW = true H*W, unpadded)
# -----------------------------------------------------------------------------
def _se_single_pass_kernel(x_ref, w1_ref, w2_ref, o_ref, *, inv_hw):
    bt, C, HW = x_ref.shape
    n_full = HW // _LANE
    tail = HW - n_full * _LANE

    # --- squeeze: chunked f32 partial sums into a tiny (bt, C) accumulator ----
    acc = jnp.zeros((bt, C), jnp.float32)
    if n_full > 0:
        def sum_body(k, a):
            start = pl.multiple_of(k * _LANE, _LANE)
            c = x_ref[:, :, pl.ds(start, _LANE)]
            return a + jnp.sum(c.astype(jnp.float32), axis=-1)

        acc = lax.fori_loop(0, n_full, sum_body, acc, unroll=(n_full <= 8))
    if tail > 0:
        c = x_ref[:, :, pl.ds(n_full * _LANE, tail)]
        acc = acc + jnp.sum(c.astype(jnp.float32), axis=-1)
    y = acc * inv_hw                                            # (bt, C) f32, true mean

    # --- excitation: Linear -> ReLU -> Linear -> Sigmoid (tiny) ---------------
    h = jnp.maximum(jnp.dot(y, w1_ref[...], preferred_element_type=jnp.float32), 0.0)
    s = jax.nn.sigmoid(jnp.dot(h, w2_ref[...], preferred_element_type=jnp.float32))
    gate = s.astype(o_ref.dtype)[:, :, None]                    # (bt, C, 1)

    # --- scale: chunked gate-apply (regular vld/vmul/vst cadence) -------------
    if n_full > 0:
        @pl.loop(0, n_full, unroll=(n_full <= 8))
        def _(k):
            start = pl.multiple_of(k * _LANE, _LANE)
            sl = pl.ds(start, _LANE)
            o_ref[:, :, sl] = x_ref[:, :, sl] * gate
    if tail > 0:
        sl = pl.ds(n_full * _LANE, tail)                        # masked tail vst
        o_ref[:, :, sl] = x_ref[:, :, sl] * gate


# -----------------------------------------------------------------------------
# Two-pass fallback for huge per-batch slabs (HW-chunked grid, reduction last)
# -----------------------------------------------------------------------------
def _se_gate_kernel(x_ref, w1_ref, w2_ref, g_ref, acc_ref, *, inv_hw, hw_true, hw_tile):
    k = pl.program_id(1)
    bt, C, _ = x_ref.shape

    @pl.when(k == 0)
    def _():
        acc_ref[...] = jnp.zeros_like(acc_ref)

    n_sub = hw_tile // _LANE
    base = k * hw_tile
    lane = lax.broadcasted_iota(jnp.int32, (bt, C, _LANE), 2)

    def sum_body(j, a):
        start = pl.multiple_of(j * _LANE, _LANE)
        c = x_ref[:, :, pl.ds(start, _LANE)].astype(jnp.float32)
        valid = (base + start + lane) < hw_true                 # mask ragged tail
        return a + jnp.sum(jnp.where(valid, c, 0.0), axis=-1)

    acc_ref[...] += lax.fori_loop(0, n_sub, sum_body,
                                  jnp.zeros((bt, C), jnp.float32),
                                  unroll=(n_sub <= 8))

    @pl.when(k == pl.num_programs(1) - 1)
    def _():
        y = acc_ref[...] * inv_hw
        h = jnp.maximum(jnp.dot(y, w1_ref[...], preferred_element_type=jnp.float32), 0.0)
        s = jax.nn.sigmoid(jnp.dot(h, w2_ref[...], preferred_element_type=jnp.float32))
        g_ref[...] = s[:, :, None]


def _se_apply_kernel(x_ref, g_ref, o_ref, *, hw_tile):
    gate = g_ref[...].astype(o_ref.dtype)                       # (1, C, 1)
    n_sub = hw_tile // _LANE

    @pl.loop(0, n_sub, unroll=(n_sub <= 8))
    def _(j):
        start = pl.multiple_of(j * _LANE, _LANE)
        sl = pl.ds(start, _LANE)
        o_ref[:, :, sl] = x_ref[:, :, sl] * gate                # OOB lanes dropped


# -----------------------------------------------------------------------------
# Sizing helpers (generation-aware)
# -----------------------------------------------------------------------------
def _vmem_capacity_bytes():
    try:
        info = pltpu.get_tpu_info()
        cap = getattr(info, "vmem_capacity_bytes", None)
        if cap:
            return int(cap)
    except Exception:
        pass
    return 64 << 20  # conservative (v7x per-TC physical VMEM)


def _vmem_limit(requested, cap):
    hard_cap = (cap * 3) // 4            # 48 MiB on 64-MiB v7x, 96 MiB on 128-MiB parts
    return int(min(max(requested, 32 << 20), hard_cap))


def _choose_b_tile(B, per_b_bytes, budget_bytes):
    """Largest divisor of B fitting the slab budget; prefer an even grid length."""
    cap = max(1, budget_bytes // max(per_b_bytes, 1))
    if B >= 2:
        cap = min(cap, max(1, B // 2))   # keep >= 2 grid steps for pipelining/megacore
    divs = [d for d in range(1, B + 1) if B % d == 0 and d <= cap]
    if not divs:
        return 1
    even = [d for d in divs if (B // d) % 2 == 0]
    return max(even) if even else max(divs)


# -----------------------------------------------------------------------------
# Wrapper
# -----------------------------------------------------------------------------
def se_attention(x_nchw, w1, w2, *, force_two_pass=False):
    """x_nchw: (B, C, H, W).  w1: (C, C//r).  w2: (C//r, C).  Both bias-free."""
    B, C, H, W = x_nchw.shape
    HW = H * W
    x = x_nchw.reshape(B, C, HW)                 # contiguous view, no HBM pass
    w1 = w1.astype(jnp.float32)                  # cast once in the wrapper
    w2 = w2.astype(jnp.float32)

    itemsize = jnp.dtype(x.dtype).itemsize
    per_b = C * HW * itemsize
    cap = _vmem_capacity_bytes()
    slab_budget = (20 << 20) if cap >= (100 << 20) else (10 << 20)
    w_bytes = (w1.size + w2.size) * 4
    inv_hw = 1.0 / HW

    if per_b <= slab_budget and not force_two_pass:
        # ------------------------- single-pass path --------------------------
        bt = _choose_b_tile(B, per_b, slab_budget)
        slab = bt * per_b
        vmem_limit = _vmem_limit(4 * slab + 2 * w_bytes + (4 << 20), cap)

        out = pl.pallas_call(
            functools.partial(_se_single_pass_kernel, inv_hw=inv_hw),
            out_shape=jax.ShapeDtypeStruct((B, C, HW), x.dtype),
            grid=(B // bt,),
            in_specs=[
                pl.BlockSpec((bt, C, HW), lambda b: (b, 0, 0)),
                pl.BlockSpec(w1.shape, lambda b: (0, 0)),     # resident weights
                pl.BlockSpec(w2.shape, lambda b: (0, 0)),
            ],
            out_specs=pl.BlockSpec((bt, C, HW), lambda b: (b, 0, 0)),
            compiler_params=pltpu.CompilerParams(
                dimension_semantics=("parallel",),
                vmem_limit_bytes=vmem_limit,
            ),
        )(x, w1, w2)
        return out.reshape(B, C, H, W)

    # --------------------------- two-pass fallback ---------------------------
    hw_tile = max(_LANE, (slab_budget // max(C * itemsize, 1)) // _LANE * _LANE)
    hw_tile = min(hw_tile, pl.cdiv(HW, _LANE) * _LANE)
    n_hw = pl.cdiv(HW, hw_tile)
    slab = C * hw_tile * itemsize
    vmem_limit = _vmem_limit(4 * slab + 2 * w_bytes + (4 << 20), cap)

    gate = pl.pallas_call(
        functools.partial(_se_gate_kernel, inv_hw=inv_hw, hw_true=HW, hw_tile=hw_tile),
        out_shape=jax.ShapeDtypeStruct((B, C, 1), jnp.float32),
        grid=(B, n_hw),
        in_specs=[
            pl.BlockSpec((1, C, hw_tile), lambda b, k: (b, 0, k)),
            pl.BlockSpec(w1.shape, lambda b, k: (0, 0)),
            pl.BlockSpec(w2.shape, lambda b, k: (0, 0)),
        ],
        out_specs=pl.BlockSpec((1, C, 1), lambda b, k: (b, 0, 0)),
        scratch_shapes=[pltpu.VMEM((1, C), jnp.float32)],
        compiler_params=pltpu.CompilerParams(
            dimension_semantics=("parallel", "arbitrary"),
            vmem_limit_bytes=vmem_limit,
        ),
    )(x, w1, w2)

    out = pl.pallas_call(
        functools.partial(_se_apply_kernel, hw_tile=hw_tile),
        out_shape=jax.ShapeDtypeStruct((B, C, HW), x.dtype),
        grid=(B, n_hw),
        in_specs=[
            pl.BlockSpec((1, C, hw_tile), lambda b, k: (b, 0, k)),
            pl.BlockSpec((1, C, 1), lambda b, k: (b, 0, 0)),
        ],
        out_specs=pl.BlockSpec((1, C, hw_tile), lambda b, k: (b, 0, k)),
        compiler_params=pltpu.CompilerParams(
            dimension_semantics=("parallel", "parallel"),
            vmem_limit_bytes=vmem_limit,
        ),
    )(x, gate)
    return out.reshape(B, C, H, W)


# -----------------------------------------------------------------------------
# Pure-JAX reference matching the PyTorch forward
# -----------------------------------------------------------------------------
def reference(x_nchw, w1, w2):
    y = jnp.mean(x_nchw.astype(jnp.float32), axis=(2, 3))       # (B, C)
    h = jnp.maximum(y @ w1.astype(jnp.float32), 0.0)            # (B, C//r)
    s = jax.nn.sigmoid(h @ w2.astype(jnp.float32))              # (B, C)
    return (x_nchw.astype(jnp.float32) * s[:, :, None, None]).astype(x_nchw.dtype)


if __name__ == "__main__":
    key = jax.random.PRNGKey(0)
    kx, k1, k2, kx2 = jax.random.split(key, 4)
    reduction = 16

    # Single-pass path (typical SE stage, HW multiple of 128 here but not required).
    B, C, H, W = 2, 64, 16, 16
    Cr = C // reduction
    x = jax.random.normal(kx, (B, C, H, W), dtype=jnp.float32)
    # nn.Linear weights, std=0.001 (init_weights), stored transposed (in, out).
    w1 = 0.001 * jax.random.normal(k1, (C, Cr), dtype=jnp.float32)
    w2 = 0.001 * jax.random.normal(k2, (Cr, C), dtype=jnp.float32)

    out = jax.block_until_ready(se_attention(x, w1, w2))
    ref = reference(x, w1, w2)
    assert out.shape == (B, C, H, W)
    assert jnp.allclose(out, ref, atol=1e-5, rtol=1e-5), \
        float(jnp.max(jnp.abs(out - ref)))

    # Exercise the two-pass (HW-chunked) fallback on a ragged 7x7 map.
    B2, C2, H2, W2 = 2, 128, 7, 7
    Cr2 = C2 // reduction
    x2 = jax.random.normal(kx2, (B2, C2, H2, W2), dtype=jnp.float32)
    w1b = 0.001 * jax.random.normal(k1, (C2, Cr2), dtype=jnp.float32)
    w2b = 0.001 * jax.random.normal(k2, (Cr2, C2), dtype=jnp.float32)

    out2 = jax.block_until_ready(se_attention(x2, w1b, w2b, force_two_pass=True))
    ref2 = reference(x2, w1b, w2b)
    assert jnp.allclose(out2, ref2, atol=1e-5, rtol=1e-5), \
        float(jnp.max(jnp.abs(out2 - ref2)))

    print("KERNEL_OK")
</pallas_src>

<mosaic_0001>
module attributes {stable_mosaic.version = 11 : i64} {
  func.func @_se_single_pass_kernel(%arg0: i32, %arg1: memref<1x64x256xf32, #tpu.memory_space<vmem>>, %arg2: memref<64x4xf32, #tpu.memory_space<vmem>>, %arg3: memref<4x64xf32, #tpu.memory_space<vmem>>, %arg4: memref<1x64x256xf32, #tpu.memory_space<vmem>>) attributes {dimension_semantics = [#tpu.dimension_semantics<parallel>], iteration_bounds = array<i64: 2>, scalar_prefetch = 0 : i64, scratch_operands = 0 : i64, tpu.core_type = #tpu.core_type<tc>, window_params = [{transform_indices = @transform_0, window_bounds = array<i64: 1, 64, 256>}, {pipeline_mode = #tpu.pipeline_mode<synchronous>, transform_indices = @transform_1, window_bounds = array<i64: 64, 4>}, {pipeline_mode = #tpu.pipeline_mode<synchronous>, transform_indices = @transform_2, window_bounds = array<i64: 4, 64>}, {transform_indices = @transform_3, window_bounds = array<i64: 1, 64, 256>}]} {
    %cst = arith.constant 0.000000e+00 : f32
    %0 = vector.broadcast %cst : f32 to vector<1x64xf32>
    %c0_i32 = arith.constant 0 : i32
    %c128_i32 = arith.constant 128 : i32
    %1 = arith.muli %c0_i32, %c128_i32 : i32
    %2 = tpu.assume_multiple %1, 128 : i32
    %c0 = arith.constant 0 : index
    %c0_0 = arith.constant 0 : index
    %3 = arith.index_cast %2 : i32 to index
    %4 = vector.load %arg1[%c0, %c0_0, %3] : memref<1x64x256xf32, #tpu.memory_space<vmem>>, vector<1x64x128xf32>
    %cst_1 = arith.constant dense<0.000000e+00> : vector<1x64xf32>
    %5 = vector.multi_reduction <add>, %4, %cst_1 [2] : vector<1x64x128xf32> to vector<1x64xf32>
    %6 = arith.addf %0, %5 : vector<1x64xf32>
    %c1_i32 = arith.constant 1 : i32
    %c128_i32_2 = arith.constant 128 : i32
    %7 = arith.muli %c1_i32, %c128_i32_2 : i32
    %8 = tpu.assume_multiple %7, 128 : i32
    %c0_3 = arith.constant 0 : index
    %c0_4 = arith.constant 0 : index
    %9 = arith.index_cast %8 : i32 to index
    %10 = vector.load %arg1[%c0_3, %c0_4, %9] : memref<1x64x256xf32, #tpu.memory_space<vmem>>, vector<1x64x128xf32>
    %cst_5 = arith.constant dense<0.000000e+00> : vector<1x64xf32>
    %11 = vector.multi_reduction <add>, %10, %cst_5 [2] : vector<1x64x128xf32> to vector<1x64xf32>
    %12 = arith.addf %6, %11 : vector<1x64xf32>
    %c2_i32 = arith.constant 2 : i32
    %cst_6 = arith.constant 3.906250e-03 : f32
    %13 = vector.broadcast %cst_6 : f32 to vector<1x64xf32>
    %14 = arith.mulf %12, %13 : vector<1x64xf32>
    %c0_7 = arith.constant 0 : index
    %c0_8 = arith.constant 0 : index
    %15 = vector.load %arg2[%c0_7, %c0_8] : memref<64x4xf32, #tpu.memory_space<vmem>>, vector<64x4xf32>
    %cst_9 = arith.constant dense<0.000000e+00> : vector<1x4xf32>
    %16 = tpu.matmul %14, %15, %cst_9 {dimension_numbers = #tpu.dot_dimension_numbers<[1], [0], [0], [1], [0, 0, 1, 1], [], []>} : vector<1x64xf32>, vector<64x4xf32>, vector<1x4xf32> -> vector<1x4xf32>
    %cst_10 = arith.constant 0.000000e+00 : f32
    %17 = vector.broadcast %cst_10 : f32 to vector<1x4xf32>
    %18 = arith.maximumf %16, %17 : vector<1x4xf32>
    %c0_11 = arith.constant 0 : index
    %c0_12 = arith.constant 0 : index
    %19 = vector.load %arg3[%c0_11, %c0_12] : memref<4x64xf32, #tpu.memory_space<vmem>>, vector<4x64xf32>
    %cst_13 = arith.constant dense<0.000000e+00> : vector<1x64xf32>
    %20 = tpu.matmul %18, %19, %cst_13 {dimension_numbers = #tpu.dot_dimension_numbers<[1], [0], [0], [1], [0, 0, 1, 1], [], []>} : vector<1x4xf32>, vector<4x64xf32>, vector<1x64xf32> -> vector<1x64xf32>
    %21 = arith.negf %20 : vector<1x64xf32>
    %22 = math.exp %21 : vector<1x64xf32>
    %cst_14 = arith.constant 1.000000e+00 : f32
    %23 = vector.broadcast %cst_14 : f32 to vector<1x64xf32>
    %24 = arith.addf %23, %22 : vector<1x64xf32>
    %25 = arith.divf %23, %24 : vector<1x64xf32>
    %26 = vector.shape_cast %25 : vector<1x64xf32> to vector<1x64x1xf32>
    %c0_i32_15 = arith.constant 0 : i32
    %c1_i32_16 = arith.constant 1 : i32
    %27 = arith.muli %c0_i32_15, %c1_i32_16 : i32
    %c0_i32_17 = arith.constant 0 : i32
    %28 = arith.addi %c0_i32_17, %27 : i32
    %c128_i32_18 = arith.constant 128 : i32
    %29 = arith.muli %28, %c128_i32_18 : i32
    %30 = tpu.assume_multiple %29, 128 : i32
    %c0_19 = arith.constant 0 : index
    %c0_20 = arith.constant 0 : index
    %31 = arith.index_cast %30 : i32 to index
    %32 = vector.load %arg1[%c0_19, %c0_20, %31] : memref<1x64x256xf32, #tpu.memory_space<vmem>>, vector<1x64x128xf32>
    %33 = vector.broadcast %26 : vector<1x64x1xf32> to vector<1x64x128xf32>
    %34 = arith.mulf %32, %33 : vector<1x64x128xf32>
    %c0_21 = arith.constant 0 : index
    %c0_22 = arith.constant 0 : index
    %35 = arith.index_cast %30 : i32 to index
    %36 = vector.load %arg4[%c0_21, %c0_22, %35] : memref<1x64x256xf32, #tpu.memory_space<vmem>>, vector<1x64x128xf32>
    tpu.vector_store %arg4[%c0_21, %c0_22, %35], %34 {strides = array<i32>} : memref<1x64x256xf32, #tpu.memory_space<vmem>>, vector<1x64x128xf32>,
    %c1_i32_23 = arith.constant 1 : i32
    %c1_i32_24 = arith.constant 1 : i32
    %37 = arith.muli %c1_i32_23, %c1_i32_24 : i32
    %c0_i32_25 = arith.constant 0 : i32
    %38 = arith.addi %c0_i32_25, %37 : i32
    %c128_i32_26 = arith.constant 128 : i32
    %39 = arith.muli %38, %c128_i32_26 : i32
    %40 = tpu.assume_multiple %39, 128 : i32
    %c0_27 = arith.constant 0 : index
    %c0_28 = arith.constant 0 : index
    %41 = arith.index_cast %40 : i32 to index
    %42 = vector.load %arg1[%c0_27, %c0_28, %41] : memref<1x64x256xf32, #tpu.memory_space<vmem>>, vector<1x64x128xf32>
    %43 = vector.broadcast %26 : vector<1x64x1xf32> to vector<1x64x128xf32>
    %44 = arith.mulf %42, %43 : vector<1x64x128xf32>
    %c0_29 = arith.constant 0 : index
    %c0_30 = arith.constant 0 : index
    %45 = arith.index_cast %40 : i32 to index
    %46 = vector.load %arg4[%c0_29, %c0_30, %45] : memref<1x64x256xf32, #tpu.memory_space<vmem>>, vector<1x64x128xf32>
    tpu.vector_store %arg4[%c0_29, %c0_30, %45], %44 {strides = array<i32>} : memref<1x64x256xf32, #tpu.memory_space<vmem>>, vector<1x64x128xf32>,
    %c2_i32_31 = arith.constant 2 : i32
    return
  }
  func.func @transform_0(%arg0: i32) -> (i32, i32, i32) {
    %c0_i32 = arith.constant 0 : i32
    %c0_i32_0 = arith.constant 0 : i32
    %c0_i32_1 = arith.constant 0 : i32
    return %arg0, %c0_i32, %c0_i32_0 : i32, i32, i32
  }
  func.func @transform_1(%arg0: i32) -> (i32, i32) {
    %c0_i32 = arith.constant 0 : i32
    %c0_i32_0 = arith.constant 0 : i32
    %c0_i32_1 = arith.constant 0 : i32
    return %c0_i32, %c0_i32_0 : i32, i32
  }
  func.func @transform_2(%arg0: i32) -> (i32, i32) {
    %c0_i32 = arith.constant 0 : i32
    %c0_i32_0 = arith.constant 0 : i32
    %c0_i32_1 = arith.constant 0 : i32
    return %c0_i32, %c0_i32_0 : i32, i32
  }
  func.func @transform_3(%arg0: i32) -> (i32, i32, i32) {
    %c0_i32 = arith.constant 0 : i32
    %c0_i32_0 = arith.constant 0 : i32
    %c0_i32_1 = arith.constant 0 : i32
    return %arg0, %c0_i32, %c0_i32_0 : i32, i32, i32
  }
}

</mosaic_0001>

<llo_original>
// kernel: tpu_custom_call.1
$region0: #{tpu_custom_call.1}
  #allocation0 [shape = 'u32[]', space=smem, size = 0x4, offset = 0x4, fixed_abs, tag = 'smem constant byte address 0x4 - core index']
  #allocation1 [shape = 'u32[144,128]{1,0:T(1,128)}', space=vmem, size = 0x12000, scoped, tag = 'internal scratch']
  %s0 = inlined_call_operand.hbm [shape: f32[2,64,256], index: 0, kind: input, shape index: {}]
  %s1 = inlined_call_operand.vmem [shape: f32[64,4], index: 1, kind: input, shape index: {}]
  %s2 = inlined_call_operand.vmem [shape: f32[4,64], index: 2, kind: input, shape index: {}]
  %s3 = inlined_call_operand.hbm [shape: f32[2,64,256], index: 3, kind: output, shape index: {}]
  %s4 = sld [smem:[#allocation0]]
  $region49: #{tpu_custom_call.1} parent=0
    _
  %s6 = ssub.s32 1, %s4
  %s7 = scalar_select 0, %s6, %s4
  $region1: #{tpu_custom_call.1} parent=0
    #allocation2 [shape = 'u8[131072]{0}', space=vmem, size = 0x20000, scoped, tag = 'input window, operand 0']
    #allocation3 [shape = 's32[2]{0}', space=sflag, size = 0x8, scoped, tag = 'scoped memory for tpu_custom_call.1']
    #allocation4 [shape = 's32[2]{0}', space=sflag, size = 0x8, scoped, tag = 'scoped memory for tpu_custom_call.1']
    #allocation5 [shape = 'u8[131072]{0}', space=vmem, size = 0x20000, scoped, tag = 'output window, operand 0']
    %8 = vsyncpa [#allocation3], 0
    %s9 = scalar_lea.sflag [#allocation3], 1
    %10 = vsyncpa %s9, 0
    %11 = vsyncpa [#allocation4], 0
    %s12 = scalar_lea.sflag [#allocation4], 1
    %13 = vsyncpa %s12, 0
    loop: start=0, step=1, limit=4
    $region2: #{tpu_custom_call.1} parent=1 // loop_pre_header
      _
    $region3: #{tpu_custom_call.1} parent=1 // loop_header
      %s15 = sphi 0, %s19
      %p16 = scmp.ge.s32.totalorder %s15, 4
      %s25 = sphi 0, %s27
      %s28 = sphi 0, %s25
      %s29 = sphi 0, %s28
      %s45 = sphi 0, %s29
      %s49 = sphi 0, %s49
      %s51 = sphi 0, %s49
      %s52 = sphi 0, %s51
      %s66 = sphi 0, %s52
      %s70 = sphi 0, %s70
      %s72 = sphi 0, %s70
      %s73 = sphi 0, %s72
      %s87 = sphi 0, %s73
      %s93 = sphi 0, %s95
      %s96 = sphi 0, %s93
      %s97 = sphi 0, %s96
      %s113 = sphi 0, %s97
    $region4: #{tpu_custom_call.1} parent=1 // loop_header_branch
      %18 = sbr.rel (%p16) target = $region8
    $region5: #{tpu_custom_call.1} parent=1 // loop_body
      %s20 = ssub.s32 %s15, 1
      %s21 = ssub.s32 %s15, 2
      %s22 = sadd.s32 %s15, 1
      %s23 = ssub.s32 %s15, %s22
      %p24 = scmp.eq.s32.totalorder %s23, 0
      %s26 = sadd.s32 %s25, 1
      %s27 = scalar_select %p24, %s25, %s26
      %p30 = pneg %p24
      %p31 = scmp.eq.s32.totalorder %s15, 1
      %p32 = por %p30, %p31
      %p33 = scmp.ne.s32.totalorder %s25, %s28
      %p34 = scmp.eq.s32.totalorder %s15, 0
      %p35 = por %p33, %p34
      %p36 = scmp.ne.s32.totalorder %s25, %s28
      %p37 = scmp.eq.s32.totalorder %s20, 1
      %p38 = por %p36, %p37
      %p39 = scmp.ne.s32.totalorder %s28, %s29
      %p40 = scmp.eq.s32.totalorder %s20, 0
      %p41 = por %p39, %p40
      %p42 = scmp.ne.s32.totalorder %s28, %s29
      %p43 = scmp.eq.s32.totalorder %s21, 1
      %p44 = por %p42, %p43
      %p46 = scmp.ne.s32.totalorder %s29, %s45
      %p47 = scmp.eq.s32.totalorder %s21, 0
      %p48 = por %p46, %p47
      %s50 = sadd.s32 %s49, 1
      %p53 = scmp.eq.s32.totalorder %s15, 1
      %p54 = scmp.ne.s32.totalorder %s49, %s51
      %p55 = scmp.eq.s32.totalorder %s15, 0
      %p56 = por %p54, %p55
      %p57 = scmp.ne.s32.totalorder %s49, %s51
      %p58 = scmp.eq.s32.totalorder %s20, 1
      %p59 = por %p57, %p58
      %p60 = scmp.ne.s32.totalorder %s51, %s52
      %p61 = scmp.eq.s32.totalorder %s20, 0
      %p62 = por %p60, %p61
      %p63 = scmp.ne.s32.totalorder %s51, %s52
      %p64 = scmp.eq.s32.totalorder %s21, 1
      %p65 = por %p63, %p64
      %p67 = scmp.ne.s32.totalorder %s52, %s66
      %p68 = scmp.eq.s32.totalorder %s21, 0
      %p69 = por %p67, %p68
      %s71 = sadd.s32 %s70, 1
      %p74 = scmp.eq.s32.totalorder %s15, 1
      %p75 = scmp.ne.s32.totalorder %s70, %s72
      %p76 = scmp.eq.s32.totalorder %s15, 0
      %p77 = por %p75, %p76
      %p78 = scmp.ne.s32.totalorder %s70, %s72
      %p79 = scmp.eq.s32.totalorder %s20, 1
      %p80 = por %p78, %p79
      %p81 = scmp.ne.s32.totalorder %s72, %s73
      %p82 = scmp.eq.s32.totalorder %s20, 0
      %p83 = por %p81, %p82
      %p84 = scmp.ne.s32.totalorder %s72, %s73
      %p85 = scmp.eq.s32.totalorder %s21, 1
      %p86 = por %p84, %p85
      %p88 = scmp.ne.s32.totalorder %s73, %s87
      %p89 = scmp.eq.s32.totalorder %s21, 0
      %p90 = por %p88, %p89
      %s91 = ssub.s32 %s15, %s22
      %p92 = scmp.eq.s32.totalorder %s91, 0
      %s94 = sadd.s32 %s93, 1
      %s95 = scalar_select %p92, %s93, %s94
      %p98 = pneg %p92
      %p99 = scmp.eq.s32.totalorder %s15, 1
      %p100 = por %p98, %p99
      %p101 = scmp.ne.s32.totalorder %s93, %s96
      %p102 = scmp.eq.s32.totalorder %s15, 0
      %p103 = por %p101, %p102
      %p104 = scmp.ne.s32.totalorder %s93, %s96
      %p105 = scmp.eq.s32.totalorder %s20, 1
      %p106 = por %p104, %p105
      %p107 = scmp.ne.s32.totalorder %s96, %s97
      %p108 = scmp.eq.s32.totalorder %s20, 0
      %p109 = por %p107, %p108
      %p110 = scmp.ne.s32.totalorder %s96, %s97
      %p111 = scmp.eq.s32.totalorder %s21, 1
      %p112 = por %p110, %p111
      %p114 = scmp.ne.s32.totalorder %s97, %s113
      %p115 = scmp.eq.s32.totalorder %s21, 0
      %p116 = por %p114, %p115
      %p117 = scmp.le.s32.totalorder 1, %s15
      %p118 = scmp.lt.s32.totalorder %s15, 3
      %p119 = pnand %p117, %p118
      %p120 = pneg %p119
      // Predicated region
      $region9: #{tpu_custom_call.1} parent=5 // pred_check
        _
      $region10: #{tpu_custom_call.1} parent=5 // pred_check_branch
        %122 = sbr.rel (%p119) target = $region12
      $region11: #{tpu_custom_call.1} parent=5 // pred_region
        %s123 = ssub.s32 %s15, 1
        // Predicated region
        $region13: #{tpu_custom_call.1} parent=11 // pred_check
          %p124 = pneg %p62
        $region14: #{tpu_custom_call.1} parent=11 // pred_check_branch
          %126 = sbr.rel (%p124) target = $region16
        $region15: #{tpu_custom_call.1} parent=11 // pred_region
          _
        $region16: #{tpu_custom_call.1} parent=11 // pred_fallthru
          _
        // Predicated region
        $region17: #{tpu_custom_call.1} parent=11 // pred_check
          %p127 = pneg %p83
        $region18: #{tpu_custom_call.1} parent=11 // pred_check_branch
          %129 = sbr.rel (%p127) target = $region20
        $region19: #{tpu_custom_call.1} parent=11 // pred_region
          _
        $region20: #{tpu_custom_call.1} parent=11 // pred_fallthru
          _
      $region12: #{tpu_custom_call.1} parent=5 // pred_fallthru
        _
      %p130 = scmp.lt.s32.totalorder %s15, 2
      // Predicated region
      $region21: #{tpu_custom_call.1} parent=5 // pred_check
        %p131 = pneg %p130
      $region22: #{tpu_custom_call.1} parent=5 // pred_check_branch
        %133 = sbr.rel (%p131) target = $region24
      $region23: #{tpu_custom_call.1} parent=5 // pred_region
        // Predicated region
        $region25: #{tpu_custom_call.1} parent=23 // pred_check
          %p134 = pneg %p35
        $region26: #{tpu_custom_call.1} parent=23 // pred_check_branch
          %136 = sbr.rel (%p134) target = $region28
        $region27: #{tpu_custom_call.1} parent=23 // pred_region
          %s137 = sand.u32 %s25, 1
          %s138 = scalar_lea.sflag [#allocation3], %s137
          %s139 = sand.u32 %s25, 1
          %s140 = smul.addr %s139, 128
          %s141 = scalar_lea.vmem [#allocation2], %s140
          %s143 = ssub.s32 2048, 2048
          %144 = vsyncadd %s138, %s143
          %s145 = smul.addr %s15, 16
          %s146 = smul.addr %s145, 128
          %s147 = scalar_lea.hbm %s0, %s146
          %s148 = sshll.u32 %s141, 4
          %s149 = int_to_ptr.vmem [resolvable:$true] %s148
          %154 = dma.hbm_to_vmem [thread:$0]  %s147, 2048, %s149, %s138, 256, 256, 16
        $region28: #{tpu_custom_call.1} parent=23 // pred_fallthru
          _
      $region24: #{tpu_custom_call.1} parent=5 // pred_fallthru
        _
      %p155 = scmp.le.s32.totalorder 1, %s15
      %p156 = scmp.lt.s32.totalorder %s15, 3
      %p157 = pnand %p155, %p156
      %p158 = pneg %p157
      // Predicated region
      $region29: #{tpu_custom_call.1} parent=5 // pred_check
        _
      $region30: #{tpu_custom_call.1} parent=5 // pred_check_branch
        %160 = sbr.rel (%p157) target = $region32
      $region31: #{tpu_custom_call.1} parent=5 // pred_region
        %s161 = ssub.s32 %s15, 1
        %s162 = sand.u32 %s28, 1
        %s163 = scalar_lea.sflag [#allocation3], %s162
        %s164 = sand.u32 %s28, 1
        %s165 = smul.addr %s164, 128
        %s166 = scalar_lea.vmem [#allocation2], %s165
        // Predicated region
        $region33: #{tpu_custom_call.1} parent=31 // pred_check
          %p167 = pneg %p41
        $region34: #{tpu_custom_call.1} parent=31 // pred_check_branch
          %169 = sbr.rel (%p167) target = $region36
        $region35: #{tpu_custom_call.1} parent=31 // pred_region
          %170 = dma.done %s163, 2048
        $region36: #{tpu_custom_call.1} parent=31 // pred_fallthru
          _
        %s171 = sand.u32 %s28, 1
        %s172 = scalar_lea.sflag [#allocation3], %s171
        %s173 = sand.u32 %s28, 1
        %s174 = smul.addr %s173, 128
        %s175 = scalar_lea.vmem [#allocation2], %s174
        %p176 = pneg %p41
        %p177 = pneg %p38
        %p178 = pneg %p62
        %p179 = pneg %p59
        %p180 = pneg %p83
        %p181 = pneg %p80
        %p182 = pneg %p109
        %p183 = pneg %p106
        %s184 = sand.u32 %s96, 1
        %s185 = scalar_lea.sflag [#allocation4], %s184
        %s186 = sand.u32 %s96, 1
        %s187 = smul.addr %s186, 128
        %s188 = scalar_lea.vmem [#allocation5], %s187
        %v189 = vld [vmem:[%s166] sm:$0xff]
        %v190 = vld [vmem:[%s166 + $0x10] sm:$0xff]
        %v191 = vld [vmem:[%s166 + $0x20] sm:$0xff]
        %v192 = vld [vmem:[%s166 + $0x30] sm:$0xff]
        %v193 = vld [vmem:[%s166 + $0x40] sm:$0xff]
        %v194 = vld [vmem:[%s166 + $0x50] sm:$0xff]
        %v195 = vld [vmem:[%s166 + $0x60] sm:$0xff]
        %v196 = vld [vmem:[%s166 + $0x70] sm:$0xff]
        %197 = vadd.xlane.f32.xlu0 %v189
        %v198 = vpop.xlane.xlu0 %197
        %199 = vadd.xlane.f32.xlu0 %v190
        %v200 = vpop.xlane.xlu0 %199
        %201 = vadd.xlane.f32.xlu0 %v191
        %v202 = vpop.xlane.xlu0 %201
        %203 = vadd.xlane.f32.xlu0 %v192
        %v204 = vpop.xlane.xlu0 %203
        %205 = vadd.xlane.f32.xlu0 %v193
        %v206 = vpop.xlane.xlu0 %205
        %207 = vadd.xlane.f32.xlu0 %v194
        %v208 = vpop.xlane.xlu0 %207
        %209 = vadd.xlane.f32.xlu0 %v195
        %v210 = vpop.xlane.xlu0 %209
        %211 = vadd.xlane.f32.xlu0 %v196
        %v212 = vpop.xlane.xlu0 %211
        %v213 = vadd.f32 %v198, 0.0
        %v214 = vadd.f32 %v200, 0.0
        %v215 = vadd.f32 %v202, 0.0
        %v216 = vadd.f32 %v204, 0.0
        %v217 = vadd.f32 %v206, 0.0
        %v218 = vadd.f32 %v208, 0.0
        %v219 = vadd.f32 %v210, 0.0
        %v220 = vadd.f32 %v212, 0.0
        %s221 = scalar_lea.vmem %s166, 8 [#allocation2]
        %v222 = vld [vmem:[%s221] sm:$0xff]
        %v223 = vld [vmem:[%s221 + $0x10] sm:$0xff]
        %v224 = vld [vmem:[%s221 + $0x20] sm:$0xff]
        %v225 = vld [vmem:[%s221 + $0x30] sm:$0xff]
        %v226 = vld [vmem:[%s221 + $0x40] sm:$0xff]
        %v227 = vld [vmem:[%s221 + $0x50] sm:$0xff]
        %v228 = vld [vmem:[%s221 + $0x60] sm:$0xff]
        %v229 = vld [vmem:[%s221 + $0x70] sm:$0xff]
        %230 = vadd.xlane.f32.xlu0 %v222
        %v231 = vpop.xlane.xlu0 %230
        %232 = vadd.xlane.f32.xlu0 %v223
        %v233 = vpop.xlane.xlu0 %232
        %234 = vadd.xlane.f32.xlu0 %v224
        %v235 = vpop.xlane.xlu0 %234
        %236 = vadd.xlane.f32.xlu0 %v225
        %v237 = vpop.xlane.xlu0 %236
        %238 = vadd.xlane.f32.xlu0 %v226
        %v239 = vpop.xlane.xlu0 %238
        %240 = vadd.xlane.f32.xlu0 %v227
        %v241 = vpop.xlane.xlu0 %240
        %242 = vadd.xlane.f32.xlu0 %v228
        %v243 = vpop.xlane.xlu0 %242
        %244 = vadd.xlane.f32.xlu0 %v229
        %v245 = vpop.xlane.xlu0 %244
        %v246 = vadd.f32 %v213, %v231
        %v247 = vadd.f32 %v214, %v233
        %v248 = vadd.f32 %v215, %v235
        %v249 = vadd.f32 %v216, %v237
        %v250 = vadd.f32 %v217, %v239
        %v251 = vadd.f32 %v218, %v241
        %v252 = vadd.f32 %v219, %v243
        %v253 = vadd.f32 %v220, %v245
        %v254 = vmul.f32 %v246, 0.00390625
        %v255 = vmul.f32 %v247, 0.00390625
        %v256 = vmul.f32 %v248, 0.00390625
        %v257 = vmul.f32 %v249, 0.00390625
        %v258 = vmul.f32 %v250, 0.00390625
        %v259 = vmul.f32 %v251, 0.00390625
        %v260 = vmul.f32 %v252, 0.00390625
        %v261 = vmul.f32 %v253, 0.00390625
        %v262 = vld [vmem:[%s1] sm:$0xff]
        %v263 = vld [vmem:[%s1 + $0x8] sm:$0xff]
        %v264 = vld [vmem:[%s1 + $0x10] sm:$0xff]
        %v265 = vld [vmem:[%s1 + $0x18] sm:$0xff]
        %v266 = vld [vmem:[%s1 + $0x20] sm:$0xff]
        %v267 = vld [vmem:[%s1 + $0x28] sm:$0xff]
        %v268 = vld [vmem:[%s1 + $0x30] sm:$0xff]
        %v269 = vld [vmem:[%s1 + $0x38] sm:$0xff]
        %v278 = vlaneseq
        %v279 = vand.u32 %v278, 127
        %v280 = vlaneseq
        %v281 = vshrl.u32 %v280, 7
        %v282 = vsub.s32 %v279, %v281
        %v283 = vrot.slane %v254, %v282
        %v284 = vadd.s32 %v279, 4294967288
        %v285 = vlaneseq
        %v286 = vshrl.u32 %v285, 7
        %v287 = vsub.s32 %v284, %v286
        %v288 = vrot.slane %v255, %v287
        %vm289 = vcmask 130112
        %v290 = vsel %vm289, %v288, %v283
        %v291 = vadd.s32 %v279, 4294967280
        %v292 = vlaneseq
        %v293 = vshrl.u32 %v292, 7
        %v294 = vsub.s32 %v291, %v293
        %v295 = vrot.slane %v256, %v294
        %vm296 = vcmask 195712
        %v297 = vsel %vm296, %v295, %v290
        %v298 = vadd.s32 %v279, 4294967272
        %v299 = vlaneseq
        %v300 = vshrl.u32 %v299, 7
        %v301 = vsub.s32 %v298, %v300
        %v302 = vrot.slane %v257, %v301
        %vm303 = vcmask 261312
        %v304 = vsel %vm303, %v302, %v297
        %v305 = vadd.s32 %v279, 4294967264
        %v306 = vlaneseq
        %v307 = vshrl.u32 %v306, 7
        %v308 = vsub.s32 %v305, %v307
        %v309 = vrot.slane %v258, %v308
        %vm310 = vcmask 326912
        %v311 = vsel %vm310, %v309, %v304
        %v312 = vadd.s32 %v279, 4294967256
        %v313 = vlaneseq
        %v314 = vshrl.u32 %v313, 7
        %v315 = vsub.s32 %v312, %v314
        %v316 = vrot.slane %v259, %v315
        %vm317 = vcmask 392512
        %v318 = vsel %vm317, %v316, %v311
        %v319 = vadd.s32 %v279, 4294967248
        %v320 = vlaneseq
        %v321 = vshrl.u32 %v320, 7
        %v322 = vsub.s32 %v319, %v321
        %v323 = vrot.slane %v260, %v322
        %vm324 = vcmask 458112
        %v325 = vsel %vm324, %v323, %v318
        %v326 = vadd.s32 %v279, 4294967240
        %v327 = vlaneseq
        %v328 = vshrl.u32 %v327, 7
        %v329 = vsub.s32 %v326, %v328
        %v330 = vrot.slane %v261, %v329
        %vm331 = vcmask 523712
        %v332 = vsel %vm331, %v330, %v325
        %vm333 = vcmask 523264
        %v334 = vsel %vm333, %v332, 0
        %336 = vmatprep.subr.mxu0 0.0
        %337 = vmatpush1.msra.mxu0 %v262
        %338 = vmatprep.subr.mxu0 0.0
        %339 = vmatpush1.msra.mxu0 %v263
        %340 = vmatprep.subr.mxu0 0.0
        %341 = vmatpush1.msra.mxu0 %v264
        %342 = vmatprep.subr.mxu0 0.0
        %343 = vmatpush1.msra.mxu0 %v265
        %344 = vmatprep.subr.mxu0 0.0
        %345 = vmatpush1.msra.mxu0 %v266
        %346 = vmatprep.subr.mxu0 0.0
        %347 = vmatpush1.msra.mxu0 %v267
        %348 = vmatprep.subr.mxu0 0.0
        %349 = vmatpush1.msra.mxu0 %v268
        %350 = vmatprep.subr.mxu0 0.0
        %351 = vmatpush1.msra.mxu0 %v269
        %352 = vmatprep.subr.mxu0 0.0
        %353 = vmatpush1.msra.mxu0 0.0
        %354 = vmatprep.subr.mxu0 0.0
        %355 = vmatpush1.msra.mxu0 0.0
        %356 = vmatprep.subr.mxu0 0.0
        %357 = vmatpush1.msra.mxu0 0.0
        %358 = vmatprep.subr.mxu0 0.0
        %359 = vmatpush1.msra.mxu0 0.0
        %360 = vmatprep.subr.mxu0 0.0
        %361 = vmatpush1.msra.mxu0 0.0
        %362 = vmatprep.subr.mxu0 0.0
        %363 = vmatpush1.msra.mxu0 0.0
        %364 = vmatprep.subr.mxu0 0.0
        %365 = vmatpush1.msra.mxu0 0.0
        %366 = vmatprep.subr.mxu0 0.0
        %367 = vmatpush1.msra.mxu0 0.0
        %368 = vmatprep.subr.mxu0 0.0
        %369 = vmatpush1.msra.mxu0 0.0
        %370 = vmatprep.subr.mxu0 0.0
        %371 = vmatpush1.msra.mxu0 0.0
        %372 = vmatprep.subr.mxu0 0.0
        %373 = vmatpush1.msra.mxu0 0.0
        %374 = vmatprep.subr.mxu0 0.0
        %375 = vmatpush1.msra.mxu0 0.0
        %376 = vmatprep.subr.mxu0 0.0
        %377 = vmatpush1.msra.mxu0 0.0
        %378 = vmatprep.subr.mxu0 0.0
        %379 = vmatpush1.msra.mxu0 0.0
        %380 = vmatprep.subr.mxu0 0.0
        %381 = vmatpush1.msra.mxu0 0.0
        %382 = vmatprep.subr.mxu0 0.0
        %383 = vmatpush1.msra.mxu0 0.0
        %384 = vmatprep.subr.mxu0 0.0
        %385 = vmatpush1.msra.mxu0 0.0
        %386 = vmatprep.subr.mxu0 0.0
        %387 = vmatpush1.msra.mxu0 0.0
        %388 = vmatprep.subr.mxu0 0.0
        %389 = vmatpush1.msra.mxu0 0.0
        %390 = vmatprep.subr.mxu0 0.0
        %391 = vmatpush1.msra.mxu0 0.0
        %392 = vmatprep.subr.mxu0 0.0
        %393 = vmatpush1.msra.mxu0 0.0
        %394 = vmatprep.subr.mxu0 0.0
        %395 = vmatpush1.msra.mxu0 0.0
        %396 = vmatprep.subr.mxu0 0.0
        %397 = vmatpush1.msra.mxu0 0.0
        %398 = vmatprep.subr.mxu0 0.0
        %399 = vmatpush1.msra.mxu0 0.0
        %400 = vmatprep.mubr.f32.mxu0 0.0
        %401 = vmatmul.mubr.f32.gmra.mrb[0].mxu0 %v334
        %v402 = vpop.f32.mrb[0].mxu0
        %v403 = vadd.f32 0.0, %v402
        %v404 = vpop.f32.mrb[0].mxu0
        %405 = vdwg.mxu0
        %v406 = vmax.f32 %v403, 0.0
        %v407 = vld [vmem:[%s2] sm:$0xf]
        %vm408 = vcmask 31744
        %v410 = vsel %vm408, %v406, 0
        %vm412 = vcmask 1043456
        %v414 = vsel %vm412, %v407, 0
        %416 = vmatprep.subr.mxu0 0.0
        %417 = vmatpush1.msra.mxu0 %v414
        %418 = vmatprep.subr.mxu0 0.0
        %419 = vmatpush1.msra.mxu0 0.0
        %420 = vmatprep.subr.mxu0 0.0
        %421 = vmatpush1.msra.mxu0 0.0
        %422 = vmatprep.subr.mxu0 0.0
        %423 = vmatpush1.msra.mxu0 0.0
        %424 = vmatprep.subr.mxu0 0.0
        %425 = vmatpush1.msra.mxu0 0.0
        %426 = vmatprep.subr.mxu0 0.0
        %427 = vmatpush1.msra.mxu0 0.0
        %428 = vmatprep.subr.mxu0 0.0
        %429 = vmatpush1.msra.mxu0 0.0
        %430 = vmatprep.subr.mxu0 0.0
        %431 = vmatpush1.msra.mxu0 0.0
        %432 = vmatprep.subr.mxu0 0.0
        %433 = vmatpush1.msra.mxu0 0.0
        %434 = vmatprep.subr.mxu0 0.0
        %435 = vmatpush1.msra.mxu0 0.0
        %436 = vmatprep.subr.mxu0 0.0
        %437 = vmatpush1.msra.mxu0 0.0
        %438 = vmatprep.subr.mxu0 0.0
        %439 = vmatpush1.msra.mxu0 0.0
        %440 = vmatprep.subr.mxu0 0.0
        %441 = vmatpush1.msra.mxu0 0.0
        %442 = vmatprep.subr.mxu0 0.0
        %443 = vmatpush1.msra.mxu0 0.0
        %444 = vmatprep.subr.mxu0 0.0
        %445 = vmatpush1.msra.mxu0 0.0
        %446 = vmatprep.subr.mxu0 0.0
        %447 = vmatpush1.msra.mxu0 0.0
        %448 = vmatprep.subr.mxu0 0.0
        %449 = vmatpush1.msra.mxu0 0.0
        %450 = vmatprep.subr.mxu0 0.0
        %451 = vmatpush1.msra.mxu0 0.0
        %452 = vmatprep.subr.mxu0 0.0
        %453 = vmatpush1.msra.mxu0 0.0
        %454 = vmatprep.subr.mxu0 0.0
        %455 = vmatpush1.msra.mxu0 0.0
        %456 = vmatprep.subr.mxu0 0.0
        %457 = vmatpush1.msra.mxu0 0.0
        %458 = vmatprep.subr.mxu0 0.0
        %459 = vmatpush1.msra.mxu0 0.0
        %460 = vmatprep.subr.mxu0 0.0
        %461 = vmatpush1.msra.mxu0 0.0
        %462 = vmatprep.subr.mxu0 0.0
        %463 = vmatpush1.msra.mxu0 0.0
        %464 = vmatprep.subr.mxu0 0.0
        %465 = vmatpush1.msra.mxu0 0.0
        %466 = vmatprep.subr.mxu0 0.0
        %467 = vmatpush1.msra.mxu0 0.0
        %468 = vmatprep.subr.mxu0 0.0
        %469 = vmatpush1.msra.mxu0 0.0
        %470 = vmatprep.subr.mxu0 0.0
        %471 = vmatpush1.msra.mxu0 0.0
        %472 = vmatprep.subr.mxu0 0.0
        %473 = vmatpush1.msra.mxu0 0.0
        %474 = vmatprep.subr.mxu0 0.0
        %475 = vmatpush1.msra.mxu0 0.0
        %476 = vmatprep.subr.mxu0 0.0
        %477 = vmatpush1.msra.mxu0 0.0
        %478 = vmatprep.subr.mxu0 0.0
        %479 = vmatpush1.msra.mxu0 0.0
        %480 = vmatprep.mubr.f32.mxu0 0.0
        %481 = vmatmul.mubr.f32.gmra.mrb[0].mxu0 %v410
        %v482 = vpop.f32.mrb[0].mxu0
        %v483 = vadd.f32 0.0, %v482
        %v484 = vpop.f32.mrb[0].mxu0
        %485 = vdwg.mxu0
        %v486 = vxor.u32 %v483, 2147483648
        %v487 = vmul.f32 %v486, 1.442695
        %v488 = vpow.pop %v487
        %v489 = vadd.f32 %v488, 1.0
        %v490 = vrcp.pop %v489
        %v491 = vmul.f32 1.0, %v490
        %v492 = vlaneseq
        %v493 = vshrl.u32 %v492, 7
        %v494 = vsub.s32 0, %v493
        %v495 = vrot.slane %v491, %v494
        %497 = vbcast.lane.b32.xlu0 %v495, 256
        %v498 = vpop.permute.xlu0 %497
        %s500 = sor.u32 256, 8
        %501 = vbcast.lane.b32.xlu0 %v495, %s500
        %v502 = vpop.permute.xlu0 %501
        %s504 = sor.u32 256, 16
        %505 = vbcast.lane.b32.xlu0 %v495, %s504
        %v506 = vpop.permute.xlu0 %505
        %s508 = sor.u32 256, 24
        %509 = vbcast.lane.b32.xlu0 %v495, %s508
        %v510 = vpop.permute.xlu0 %509
        %s512 = sor.u32 256, 32
        %513 = vbcast.lane.b32.xlu0 %v495, %s512
        %v514 = vpop.permute.xlu0 %513
        %s516 = sor.u32 256, 40
        %517 = vbcast.lane.b32.xlu0 %v495, %s516
        %v518 = vpop.permute.xlu0 %517
        %s520 = sor.u32 256, 48
        %521 = vbcast.lane.b32.xlu0 %v495, %s520
        %v522 = vpop.permute.xlu0 %521
        %s524 = sor.u32 256, 56
        %525 = vbcast.lane.b32.xlu0 %v495, %s524
        %v526 = vpop.permute.xlu0 %525
        %v527 = vmul.f32 %v189, %v498
        %v528 = vmul.f32 %v190, %v502
        %v529 = vmul.f32 %v191, %v506
        %v530 = vmul.f32 %v192, %v510
        %v531 = vmul.f32 %v193, %v514
        %v532 = vmul.f32 %v194, %v518
        %v533 = vmul.f32 %v195, %v522
        %v534 = vmul.f32 %v196, %v526
        %535 = vst [vmem:[%s188] sm:$0xff] %v527
        %536 = vst [vmem:[%s188 + $0x10] sm:$0xff] %v528
        %537 = vst [vmem:[%s188 + $0x20] sm:$0xff] %v529
        %538 = vst [vmem:[%s188 + $0x30] sm:$0xff] %v530
        %539 = vst [vmem:[%s188 + $0x40] sm:$0xff] %v531
        %540 = vst [vmem:[%s188 + $0x50] sm:$0xff] %v532
        %541 = vst [vmem:[%s188 + $0x60] sm:$0xff] %v533
        %542 = vst [vmem:[%s188 + $0x70] sm:$0xff] %v534
        %v543 = vld [vmem:[%s221] sm:$0xff]
        %v544 = vld [vmem:[%s221 + $0x10] sm:$0xff]
        %v545 = vld [vmem:[%s221 + $0x20] sm:$0xff]
        %v546 = vld [vmem:[%s221 + $0x30] sm:$0xff]
        %v547 = vld [vmem:[%s221 + $0x40] sm:$0xff]
        %v548 = vld [vmem:[%s221 + $0x50] sm:$0xff]
        %v549 = vld [vmem:[%s221 + $0x60] sm:$0xff]
        %v550 = vld [vmem:[%s221 + $0x70] sm:$0xff]
        %v551 = vmul.f32 %v543, %v498
        %v552 = vmul.f32 %v544, %v502
        %v553 = vmul.f32 %v545, %v506
        %v554 = vmul.f32 %v546, %v510
        %v555 = vmul.f32 %v547, %v514
        %v556 = vmul.f32 %v548, %v518
        %v557 = vmul.f32 %v549, %v522
        %v558 = vmul.f32 %v550, %v526
        %s559 = scalar_lea.vmem %s188, 8 [#allocation5]
        %560 = vst [vmem:[%s559] sm:$0xff] %v551
        %561 = vst [vmem:[%s559 + $0x10] sm:$0xff] %v552
        %562 = vst [vmem:[%s559 + $0x20] sm:$0xff] %v553
        %563 = vst [vmem:[%s559 + $0x30] sm:$0xff] %v554
        %564 = vst [vmem:[%s559 + $0x40] sm:$0xff] %v555
        %565 = vst [vmem:[%s559 + $0x50] sm:$0xff] %v556
        %566 = vst [vmem:[%s559 + $0x60] sm:$0xff] %v557
        %567 = vst [vmem:[%s559 + $0x70] sm:$0xff] %v558
        %s568 = sand.u32 %s96, 1
        %s569 = scalar_lea.sflag [#allocation4], %s568
        %s570 = sand.u32 %s96, 1
        %s571 = smul.addr %s570, 128
        %s572 = scalar_lea.vmem [#allocation5], %s571
        // Predicated region
        $region37: #{tpu_custom_call.1} parent=31 // pred_check
          %p573 = pneg %p106
        $region38: #{tpu_custom_call.1} parent=31 // pred_check_branch
          %575 = sbr.rel (%p573) target = $region40
        $region39: #{tpu_custom_call.1} parent=31 // pred_region
          %s577 = ssub.s32 2048, 2048
          %578 = vsyncadd %s569, %s577
          %s579 = smul.addr %s20, 16
          %s580 = smul.addr %s579, 128
          %s581 = scalar_lea.hbm %s3, %s580
          %s582 = sshll.u32 %s572, 4
          %s583 = int_to_ptr.vmem [resolvable:$true] %s582
          %588 = dma.vmem_to_hbm [thread:$0]  %s583, 2048, %s581, %s569, 256, 256, 16
        $region40: #{tpu_custom_call.1} parent=31 // pred_fallthru
          _
      $region32: #{tpu_custom_call.1} parent=5 // pred_fallthru
        _
      %p589 = scmp.le.s32.totalorder 2, %s15
      // Predicated region
      $region41: #{tpu_custom_call.1} parent=5 // pred_check
        %p590 = pneg %p589
      $region42: #{tpu_custom_call.1} parent=5 // pred_check_branch
        %592 = sbr.rel (%p590) target = $region44
      $region43: #{tpu_custom_call.1} parent=5 // pred_region
        %s593 = ssub.s32 %s15, 2
        // Predicated region
        $region45: #{tpu_custom_call.1} parent=43 // pred_check
          %p594 = pneg %p112
        $region46: #{tpu_custom_call.1} parent=43 // pred_check_branch
          %596 = sbr.rel (%p594) target = $region48
        $region47: #{tpu_custom_call.1} parent=43 // pred_region
          %s597 = sand.u32 %s97, 1
          %s598 = scalar_lea.sflag [#allocation4], %s597
          %s599 = sand.u32 %s97, 1
          %s600 = smul.addr %s599, 128
          %s601 = scalar_lea.vmem [#allocation5], %s600
          %602 = dma.done %s598, 2048
        $region48: #{tpu_custom_call.1} parent=43 // pred_fallthru
          _
      $region44: #{tpu_custom_call.1} parent=5 // pred_fallthru
        _
    $region6: #{tpu_custom_call.1} parent=1 // loop_footer
      %s19 = sadd.s32 1, %s15
    $region7: #{tpu_custom_call.1} parent=1 // loop_footer_branch
      %14 = sbr.rel target = $region3
    $region8: #{tpu_custom_call.1} parent=1 // loop_exit
      _
    %603 = vsyncpa [#allocation3], 1
    %s604 = scalar_lea.sflag [#allocation3], 1
    %605 = vsyncpa %s604, 1
    %606 = vsyncpa [#allocation4], 1
    %s607 = scalar_lea.sflag [#allocation4], 1
    %608 = vsyncpa %s607, 1

</llo_original>
